<compile_context>
chip_gen: v7x
topology: tpu7x:2x2x1
jax: 0.10.0
libtpu: 0.0.40
codegen_flags: <defaults>
</compile_context>

<pallas_src>
import functools

import jax
import jax.numpy as jnp
from jax.experimental import pallas as pl
from jax.experimental.pallas import tpu as pltpu

_LANES = 128


def _round_up(x: int, m: int) -> int:
    return ((x + m - 1) // m) * m


def _tensorcores_per_chip() -> int:
    """2 for v7x-class chips (2 TensorCores per Pallas device), else 1."""
    try:
        dev = jax.devices()[0]
        if dev.platform != "tpu":
            return 1
        kind = dev.device_kind.lower().replace(" ", "")
        if "v7" in kind or "7x" in kind:
            return 2
    except Exception:  # pragma: no cover - defensive
        pass
    return 1


def _rmse_partial_kernel(yhat_ref, y_ref, acc_ref, *,
                         tile_rows, acc_rows, steps, nblocks, rows_valid,
                         needs_mask):
    """Accumulate per-(sublane,lane) partial sums of (yhat - y)^2.

    acc_ref is the (1, acc_rows, 128) float32 output block owned by this
    parallel split; it stays resident across the inner reduction axis.
    acc_rows >= 8 gives several independent VPU add chains.
    """
    i = pl.program_id(0)   # parallel split (2nd TensorCore on v7x-class)
    j = pl.program_id(1)   # reduction steps within the split

    @pl.when(j == 0)
    def _():
        acc_ref[...] = jnp.zeros_like(acc_ref)

    d = yhat_ref[...].astype(jnp.float32) - y_ref[...].astype(jnp.float32)

    def _accumulate(d2):
        # (tile_rows,128) -> (tile_rows/acc_rows, acc_rows, 128): vreg-aligned,
        # so the axis-0 sum is pure VPU adds across independent chains.
        part = d2.reshape(tile_rows // acc_rows, acc_rows, _LANES).sum(axis=0)
        acc_ref[...] += part[None, :, :]

    if needs_mask:
        blk = i * steps + j                 # logical (un-clamped) block index
        is_edge = blk >= nblocks - 1        # only the edge block can be ragged

        @pl.when(jnp.logical_not(is_edge))
        def _():
            _accumulate(d * d)

        @pl.when(is_edge)
        def _():
            # Rows valid in this logical block; <= 0 for overflow blocks whose
            # index_map clamped to the last real block (contributes zero).
            valid = rows_valid - blk * tile_rows
            row = jax.lax.broadcasted_iota(jnp.int32, (tile_rows, _LANES), 0)
            dm = jnp.where(row < valid, d, jnp.float32(0.0))
            _accumulate(dm * dm)
    else:
        _accumulate(d * d)


def rmse_loss(yhat: jax.Array, y: jax.Array, eps: float = 1e-6,
              tile_rows: int | None = None, num_splits: int | None = None,
              min_kernel_elements: int = 65536) -> jax.Array:
    assert yhat.shape == y.shape, "yhat and y must have the same shape"
    count = yhat.size
    if count == 0:
        return jnp.sqrt(jnp.float32(eps))

    # Flatten in the native dtype (reshape of contiguous data is free).
    yhat_f = jnp.ravel(yhat)
    y_f = jnp.ravel(y)

    itemsize = jnp.dtype(yhat.dtype).itemsize
    # Native sublane tile height: 8 for 32-bit, 32 covers bf16/int8/fp8.
    align = 8 if itemsize >= 4 else 32
    rows = count // _LANES
    rows_main = (rows // align) * align
    main = rows_main * _LANES

    # Small-input fallback: launch + pipeline ramp dominates tiny shapes.
    if main == 0 or count < min_kernel_elements:
        d = yhat_f.astype(jnp.float32) - y_f.astype(jnp.float32)
        return jnp.sqrt(jnp.sum(d * d) * jnp.float32(1.0 / count)
                        + jnp.float32(eps))

    # Leftover elements (< align rows + < 128 lanes): trivial host-side sum.
    sq_tail = jnp.float32(0.0)
    if main != count:
        dt = yhat_f[main:].astype(jnp.float32) - y_f[main:].astype(jnp.float32)
        sq_tail = jnp.sum(dt * dt)
        yhat_f = yhat_f[:main]
        y_f = y_f[:main]
    yhat2 = yhat_f.reshape(rows_main, _LANES)
    y2 = y_f.reshape(rows_main, _LANES)

    multi_core = _tensorcores_per_chip() > 1

    # Tile sizing: big blocks for HBM-bound streaming.  4096x128xf32 = 2 MiB
    # per block (8 MiB double-buffered across both inputs); 8192 on v7x-class
    # to amortize per-step overhead at ~3.2 TB/s.
    if tile_rows is None:
        tile_rows = 8192 if multi_core else 4096
    tr = min(_round_up(tile_rows, align), rows_main)   # multiple of `align`
    nblocks = pl.cdiv(rows_main, tr)

    splits = num_splits if num_splits is not None else (2 if multi_core else 1)
    splits = max(1, min(splits, nblocks))
    steps = pl.cdiv(nblocks, splits)
    needs_mask = (splits * steps * tr) != rows_main

    # Independent accumulation chains (largest power-of-two divisor of tr).
    acc_rows = next(a for a in (64, 32, 16, 8) if tr % a == 0)

    # Explicit scoped-VMEM budget: 2 inputs x 2 buffers + headroom, so large
    # tiles also fit on v5e (16 MiB default) and stay under v7x's 64 MiB.
    in_block_bytes = tr * _LANES * itemsize
    vmem_limit = int(min(64 * 2**20, max(24 * 2**20,
                                         6 * in_block_bytes + (2 << 20))))

    def in_map(i, j):
        # Clamp logical blocks that fall past the array (possible when nblocks
        # is not a multiple of `splits`); their contribution is masked to 0.
        return (jnp.minimum(i * steps + j, nblocks - 1), 0)

    kernel = functools.partial(
        _rmse_partial_kernel,
        tile_rows=tr, acc_rows=acc_rows, steps=steps, nblocks=nblocks,
        rows_valid=rows_main, needs_mask=needs_mask)

    if splits > 1 and multi_core:
        # Guarantee per-TensorCore sharding on v7x-class; retry with plain
        # PARALLEL if core-parallel lowering is unavailable on this stack.
        semantics_candidates = (pltpu.CORE_PARALLEL, pltpu.PARALLEL)
    elif splits > 1:
        semantics_candidates = (pltpu.PARALLEL,)
    else:
        semantics_candidates = (pltpu.ARBITRARY,)

    def _run(lead_sem):
        return pl.pallas_call(
            kernel,
            out_shape=jax.ShapeDtypeStruct((splits, acc_rows, _LANES),
                                           jnp.float32),
            grid_spec=pltpu.PrefetchScalarGridSpec(
                num_scalar_prefetch=0,
                grid=(splits, steps),
                in_specs=[
                    pl.BlockSpec((tr, _LANES), in_map),
                    pl.BlockSpec((tr, _LANES), in_map),
                ],
                out_specs=pl.BlockSpec((1, acc_rows, _LANES),
                                       lambda i, j: (i, 0, 0)),
            ),
            compiler_params=pltpu.CompilerParams(
                dimension_semantics=(lead_sem, pltpu.ARBITRARY),
                vmem_limit_bytes=vmem_limit,
            ),
            cost_estimate=pl.CostEstimate(
                flops=3 * main,
                transcendentals=0,
                bytes_accessed=2 * main * itemsize),
        )(yhat2, y2)

    partials = None
    last_err = None
    for sem in semantics_candidates:
        try:
            partials = _run(sem)
            break
        except Exception as e:  # fall back only from CORE_PARALLEL
            last_err = e
    if partials is None:
        raise last_err

    # Final combine: tiny (splits x acc_rows x 128) reduce + sqrt(mean + eps).
    total = jnp.sum(partials, dtype=jnp.float32) + sq_tail
    return jnp.sqrt(total * jnp.float32(1.0 / count) + jnp.float32(eps))


def _reference(yhat, y, eps):
    d = yhat.astype(jnp.float32) - y.astype(jnp.float32)
    return jnp.sqrt(jnp.mean(d * d) + jnp.float32(eps))


if __name__ == "__main__":
    key = jax.random.PRNGKey(0)
    k1, k2, k3, k4 = jax.random.split(key, 4)

    # Primary small shape (distillation-style NCHW feature maps).  Force the
    # Pallas path (the default dispatch would use the tiny-input fallback).
    yhat = jax.random.normal(k1, (2, 4, 16, 16), dtype=jnp.float32)
    y = jax.random.normal(k2, (2, 4, 16, 16), dtype=jnp.float32)
    loss = jax.block_until_ready(
        rmse_loss(yhat, y, eps=1e-6, min_kernel_elements=0))
    ref = _reference(yhat, y, 1e-6)
    assert jnp.allclose(loss, ref, rtol=1e-5, atol=1e-6), (loss, ref)

    # Ragged element count (not a multiple of 128): aligned prefix through the
    # kernel, tiny leftover folded host-side — no full-array pad copy.
    yh2 = jax.random.normal(k3, (2, 3, 17, 19), dtype=jnp.float32)
    yb2 = jax.random.normal(k4, (2, 3, 17, 19), dtype=jnp.float32)
    loss2 = jax.block_until_ready(
        rmse_loss(yh2, yb2, eps=1e-6, min_kernel_elements=0))
    ref2 = _reference(yh2, yb2, 1e-6)
    assert jnp.allclose(loss2, ref2, rtol=1e-5, atol=1e-6), (loss2, ref2)

    # Larger shape via the default dispatch: multi-step reduction with a
    # partial last block (small tile forces it) and, on v7x-class devices,
    # the CORE_PARALLEL 2-way split.
    yh3 = jax.random.normal(k1, (2, 8, 136, 128), dtype=jnp.float32)
    yb3 = jax.random.normal(k2, (2, 8, 136, 128), dtype=jnp.float32)
    loss3 = jax.block_until_ready(rmse_loss(yh3, yb3, eps=1e-6, tile_rows=512))
    ref3 = _reference(yh3, yb3, 1e-6)
    assert jnp.allclose(loss3, ref3, rtol=1e-4, atol=1e-6), (loss3, ref3)

    print("KERNEL_OK")
</pallas_src>

<mosaic_0001>
module attributes {stable_mosaic.version = 11 : i64} {
  func.func @_rmse_partial_kernel(%arg0: i32, %arg1: i32, %arg2: memref<16x128xf32, #tpu.memory_space<vmem>>, %arg3: memref<16x128xf32, #tpu.memory_space<vmem>>, %arg4: memref<1x16x128xf32, #tpu.memory_space<vmem>>) attributes {dimension_semantics = [#tpu.dimension_semantics<arbitrary>, #tpu.dimension_semantics<arbitrary>], iteration_bounds = array<i64: 1, 1>, scalar_prefetch = 0 : i64, scratch_operands = 0 : i64, tpu.core_type = #tpu.core_type<tc>, window_params = [{transform_indices = @transform_0, window_bounds = array<i64: 16, 128>}, {transform_indices = @transform_1, window_bounds = array<i64: 16, 128>}, {transform_indices = @transform_2, window_bounds = array<i64: 1, 16, 128>}]} {
    %c0_i32 = arith.constant 0 : i32
    %0 = arith.cmpi eq, %arg1, %c0_i32 : i32
    %1 = arith.extui %0 : i1 to i32
    %c0_i32_0 = arith.constant 0 : i32
    %2 = arith.cmpi ne, %1, %c0_i32_0 : i32
    scf.if %2 {
      %cst_10 = arith.constant 0.000000e+00 : f32
      %13 = vector.broadcast %cst_10 : f32 to vector<1x16x128xf32>
      %c0_11 = arith.constant 0 : index
      %c0_12 = arith.constant 0 : index
      %c0_13 = arith.constant 0 : index
      %14 = vector.load %arg4[%c0_11, %c0_12, %c0_13] : memref<1x16x128xf32, #tpu.memory_space<vmem>>, vector<1x16x128xf32>
      tpu.vector_store %arg4[%c0_11, %c0_12, %c0_13], %13 {strides = array<i32>} : memref<1x16x128xf32, #tpu.memory_space<vmem>>, vector<1x16x128xf32>,
    } else {
    }
    %c0 = arith.constant 0 : index
    %c0_1 = arith.constant 0 : index
    %3 = vector.load %arg2[%c0, %c0_1] : memref<16x128xf32, #tpu.memory_space<vmem>>, vector<16x128xf32>
    %c0_2 = arith.constant 0 : index
    %c0_3 = arith.constant 0 : index
    %4 = vector.load %arg3[%c0_2, %c0_3] : memref<16x128xf32, #tpu.memory_space<vmem>>, vector<16x128xf32>
    %5 = arith.subf %3, %4 : vector<16x128xf32>
    %6 = arith.mulf %5, %5 : vector<16x128xf32>
    %7 = vector.shape_cast %6 : vector<16x128xf32> to vector<1x16x128xf32>
    %cst = arith.constant dense<0.000000e+00> : vector<16x128xf32>
    %8 = vector.multi_reduction <add>, %7, %cst [0] : vector<1x16x128xf32> to vector<16x128xf32>
    %c0_4 = arith.constant 0 : index
    %c0_5 = arith.constant 0 : index
    %c0_6 = arith.constant 0 : index
    %9 = vector.load %arg4[%c0_4, %c0_5, %c0_6] : memref<1x16x128xf32, #tpu.memory_space<vmem>>, vector<1x16x128xf32>
    %10 = vector.shape_cast %8 : vector<16x128xf32> to vector<1x16x128xf32>
    %11 = arith.addf %9, %10 : vector<1x16x128xf32>
    %c0_7 = arith.constant 0 : index
    %c0_8 = arith.constant 0 : index
    %c0_9 = arith.constant 0 : index
    %12 = vector.load %arg4[%c0_7, %c0_8, %c0_9] : memref<1x16x128xf32, #tpu.memory_space<vmem>>, vector<1x16x128xf32>
    tpu.vector_store %arg4[%c0_7, %c0_8, %c0_9], %11 {strides = array<i32>} : memref<1x16x128xf32, #tpu.memory_space<vmem>>, vector<1x16x128xf32>,
    return
  }
  func.func @transform_0(%arg0: i32, %arg1: i32) -> (i32, i32) {
    %c1_i32 = arith.constant 1 : i32
    %0 = arith.muli %arg0, %c1_i32 : i32
    %1 = arith.addi %0, %arg1 : i32
    %c0_i32 = arith.constant 0 : i32
    %2 = arith.minsi %1, %c0_i32 : i32
    %c0_i32_0 = arith.constant 0 : i32
    %c0_i32_1 = arith.constant 0 : i32
    return %2, %c0_i32_0 : i32, i32
  }
  func.func @transform_1(%arg0: i32, %arg1: i32) -> (i32, i32) {
    %c1_i32 = arith.constant 1 : i32
    %0 = arith.muli %arg0, %c1_i32 : i32
    %1 = arith.addi %0, %arg1 : i32
    %c0_i32 = arith.constant 0 : i32
    %2 = arith.minsi %1, %c0_i32 : i32
    %c0_i32_0 = arith.constant 0 : i32
    %c0_i32_1 = arith.constant 0 : i32
    return %2, %c0_i32_0 : i32, i32
  }
  func.func @transform_2(%arg0: i32, %arg1: i32) -> (i32, i32, i32) {
    %c0_i32 = arith.constant 0 : i32
    %c0_i32_0 = arith.constant 0 : i32
    %c0_i32_1 = arith.constant 0 : i32
    return %arg0, %c0_i32, %c0_i32_0 : i32, i32, i32
  }
}

</mosaic_0001>

<llo_original>
// kernel: tpu_custom_call.1
$region0: #{tpu_custom_call.1}
  #allocation0 [shape = 'u32[]', space=smem, size = 0x4, offset = 0x4, fixed_abs, tag = 'smem constant byte address 0x4 - core index']
  #allocation1 [shape = 'u32[144,128]{1,0:T(1,128)}', space=vmem, size = 0x12000, scoped, tag = 'internal scratch']
  %s0 = inlined_call_operand.hbm [shape: f32[16,128], index: 0, kind: input, shape index: {}]
  %s1 = inlined_call_operand.hbm [shape: f32[16,128], index: 1, kind: input, shape index: {}]
  %s2 = inlined_call_operand.hbm [shape: f32[1,16,128], index: 2, kind: output, shape index: {}]
  %s3 = sld [smem:[#allocation0]]
  $region30: #{tpu_custom_call.1} parent=0
    _
  %s5 = ssub.s32 1, %s3
  %s6 = scalar_select 0, %s5, %s3
  $region1: #{tpu_custom_call.1} parent=0
    #allocation2 [shape = 'u8[8192]{0}', space=vmem, size = 0x2000, scoped, tag = 'input window, operand 0, single buffered']
    #allocation3 [shape = 's32[1]{0}', space=sflag, size = 0x4, scoped, tag = 'scoped memory for tpu_custom_call.1']
    #allocation4 [shape = 's32[1]{0}', space=sflag, size = 0x4, scoped, tag = 'scoped memory for tpu_custom_call.1']
    #allocation5 [shape = 'u8[8192]{0}', space=vmem, size = 0x2000, scoped, tag = 'input window, operand 1, single buffered']
    #allocation6 [shape = 's32[1]{0}', space=sflag, size = 0x4, scoped, tag = 'scoped memory for tpu_custom_call.1']
    #allocation7 [shape = 'u8[8192]{0}', space=vmem, size = 0x2000, scoped, tag = 'output window, operand 0, single buffered']
    %7 = vsyncpa [#allocation3], 0
    %8 = vsyncpa [#allocation6], 0
    %9 = vsyncpa [#allocation4], 0
    // Predicated region
    $region2: #{tpu_custom_call.1} parent=1 // pred_check
      _
    $region3: #{tpu_custom_call.1} parent=1 // pred_check_branch
      %11 = sbr.rel (0) target = $region5
    $region4: #{tpu_custom_call.1} parent=1 // pred_region
      %s12 = sadd.s32 0, 0
      %p13 = scmp.lt.s32.totalorder %s12, 0
      %s14 = scalar_select %p13, %s12, 0
      %s15 = smul.u32 2, %s14
      %s17 = ssub.s32 256, 256
      %18 = vsyncadd [#allocation3], %s17
      %s19 = smul.addr %s15, 128
      %s20 = scalar_lea.hbm %s0, %s19
      %s21 = sshll.u32 [#allocation2], 4
      %s22 = int_to_ptr.vmem [resolvable:$true] %s21
      %27 = dma.hbm_to_vmem [thread:$0]  %s20, 256, %s22, [#allocation3], 128, 128, 8
    $region5: #{tpu_custom_call.1} parent=1 // pred_fallthru
      _
    // Predicated region
    $region6: #{tpu_custom_call.1} parent=1 // pred_check
      _
    $region7: #{tpu_custom_call.1} parent=1 // pred_check_branch
      %29 = sbr.rel (0) target = $region9
    $region8: #{tpu_custom_call.1} parent=1 // pred_region
      %s30 = sadd.s32 0, 0
      %p31 = scmp.lt.s32.totalorder %s30, 0
      %s32 = scalar_select %p31, %s30, 0
      %s33 = smul.u32 2, %s32
      %s35 = ssub.s32 256, 256
      %36 = vsyncadd [#allocation6], %s35
      %s37 = smul.addr %s33, 128
      %s38 = scalar_lea.hbm %s1, %s37
      %s39 = sshll.u32 [#allocation5], 4
      %s40 = int_to_ptr.vmem [resolvable:$true] %s39
      %45 = dma.hbm_to_vmem [thread:$0]  %s38, 256, %s40, [#allocation6], 128, 128, 8
    $region9: #{tpu_custom_call.1} parent=1 // pred_fallthru
      _
    // Predicated region
    $region10: #{tpu_custom_call.1} parent=1 // pred_check
      _
    $region11: #{tpu_custom_call.1} parent=1 // pred_check_branch
      %47 = sbr.rel (0) target = $region13
    $region12: #{tpu_custom_call.1} parent=1 // pred_region
      %48 = dma.done [#allocation3], 256
    $region13: #{tpu_custom_call.1} parent=1 // pred_fallthru
      _
    // Predicated region
    $region14: #{tpu_custom_call.1} parent=1 // pred_check
      _
    $region15: #{tpu_custom_call.1} parent=1 // pred_check_branch
      %50 = sbr.rel (0) target = $region17
    $region16: #{tpu_custom_call.1} parent=1 // pred_region
      %51 = dma.done [#allocation6], 256
    $region17: #{tpu_custom_call.1} parent=1 // pred_fallthru
      _
    %s52 = sadd.s32 0, 0
    %p53 = scmp.lt.s32.totalorder %s52, 0
    %s54 = scalar_select %p53, %s52, 0
    %s55 = smul.u32 2, %s54
    %s56 = sadd.s32 0, 0
    %p57 = scmp.lt.s32.totalorder %s56, 0
    %s58 = scalar_select %p57, %s56, 0
    %s59 = smul.u32 2, %s58
    %p60 = scmp.eq.s32.totalorder 0, 0
    // Predicated region
    $region18: #{tpu_custom_call.1} parent=1 // pred_check
      %p61 = pneg %p60
    $region19: #{tpu_custom_call.1} parent=1 // pred_check_branch
      %63 = sbr.rel (%p61) target = $region21
    $region20: #{tpu_custom_call.1} parent=1 // pred_region
      %64 = vst [vmem:[#allocation7] sm:$0xff] 0.0
      %65 = vst [vmem:[#allocation7 + $0x8] sm:$0xff] 0.0
    $region21: #{tpu_custom_call.1} parent=1 // pred_fallthru
      _
    %v66 = vld [vmem:[#allocation2] sm:$0xff]
    %v67 = vld [vmem:[#allocation2 + $0x8] sm:$0xff]
    %v68 = vld [vmem:[#allocation5] sm:$0xff]
    %v69 = vld [vmem:[#allocation5 + $0x8] sm:$0xff]
    %v70 = vsub.f32 %v66, %v68
    %v71 = vsub.f32 %v67, %v69
    %v72 = vmul.f32 %v70, %v70
    %v73 = vmul.f32 %v71, %v71
    %v74 = vadd.f32 %v72, 0.0
    %v75 = vadd.f32 %v73, 0.0
    %v76 = vld [vmem:[#allocation7] sm:$0xff]
    %v77 = vld [vmem:[#allocation7 + $0x8] sm:$0xff]
    %v78 = vadd.f32 %v76, %v74
    %v79 = vadd.f32 %v77, %v75
    %80 = vst [vmem:[#allocation7] sm:$0xff] %v78
    %81 = vst [vmem:[#allocation7 + $0x8] sm:$0xff] %v79
    // Predicated region
    $region22: #{tpu_custom_call.1} parent=1 // pred_check
      _
    $region23: #{tpu_custom_call.1} parent=1 // pred_check_branch
      %83 = sbr.rel (0) target = $region25
    $region24: #{tpu_custom_call.1} parent=1 // pred_region
      %s85 = ssub.s32 256, 256
      %86 = vsyncadd [#allocation4], %s85
      %s87 = sshll.u32 [#allocation7], 4
      %s88 = int_to_ptr.vmem [resolvable:$true] %s87
      %93 = dma.vmem_to_hbm [thread:$0]  %s88, 256, %s2, [#allocation4], 128, 128, 8
    $region25: #{tpu_custom_call.1} parent=1 // pred_fallthru
      _
    // Predicated region
    $region26: #{tpu_custom_call.1} parent=1 // pred_check
      _
    $region27: #{tpu_custom_call.1} parent=1 // pred_check_branch
      %95 = sbr.rel (0) target = $region29
    $region28: #{tpu_custom_call.1} parent=1 // pred_region
      %96 = dma.done [#allocation4], 256
    $region29: #{tpu_custom_call.1} parent=1 // pred_fallthru
      _
    %97 = vsyncpa [#allocation3], 1
    %98 = vsyncpa [#allocation6], 1
    %99 = vsyncpa [#allocation4], 1

</llo_original>
